<compile_context>
chip_gen: v7x
topology: tpu7x:2x2x1
jax: 0.10.0
libtpu: 0.0.40
codegen_flags: <defaults>
</compile_context>

<pallas_src>
import jax
import jax.numpy as jnp
from jax.experimental import pallas as pl
from jax.experimental.pallas import tpu as pltpu


# ---- packed-parameter slab layout (rows x 128 lanes, f32, zero-padded) ----
#   rows   0: 32   w1  (fc1 weight, (32 in, 32 out) -> out cols 0..31 live)
#   row   32       b1  (lanes 0..31 live)                     [rows 32..39 block]
#   rows  40:168   w2  (fc2 weight, (32 in, 16 out) -> rows 40..71 / cols 0..15 live)
#   row  168       b2  (lanes 0..15 live)                     [rows 168..175 block]
#   rows 176:304   w3  (fc3 weight, (16 in, 3 out)  -> rows 176..191 / cols 0..2 live)
#   row  304       b3  (lanes 0..2 live)                      [rows 304..311 block]
P_ROWS = 312
LANES = 128
IN_DIM = 8 * 4   # 32
OUT_DIM = 3


def actor_kernel(x_ref, p_ref, o_ref):
    x = x_ref[...]                       # (B, 32)
    w1 = p_ref[0:32, :]                  # (32, 128)   cols >=32 are zero
    b1 = p_ref[32:33, :]                 # (1, 128)
    w2 = p_ref[40:168, :]                # (128, 128)  rows >=32 / cols >=16 zero
    b2 = p_ref[168:169, :]               # (1, 128)
    w3 = p_ref[176:304, :]               # (128, 128)  rows >=16 / cols >=3 zero
    b3 = p_ref[304:305, :]               # (1, 128)

    h1 = jnp.maximum(jnp.dot(x, w1, preferred_element_type=jnp.float32) + b1, 0.0)   # (B,128)
    h2 = jnp.maximum(jnp.dot(h1, w2, preferred_element_type=jnp.float32) + b2, 0.0)  # (B,128)
    logits = jnp.dot(h2, w3, preferred_element_type=jnp.float32) + b3                # (B,128)

    # softmax over dim=0 (the batch axis), matching F.softmax(x, dim=0).
    # Padded lanes (>=3) are all-zero logits -> uniform 1/B; discarded by the wrapper.
    m = jnp.max(logits, axis=0, keepdims=True)
    e = jnp.exp(logits - m)
    o_ref[...] = e / jnp.sum(e, axis=0, keepdims=True)


def pack_params(params):
    """Pack (w1t, b1, w2t, b2, w3t, b3) into one zero-padded (312, 128) f32 slab."""
    w1t, b1, w2t, b2, w3t, b3 = params
    slab = jnp.zeros((P_ROWS, LANES), jnp.float32)
    slab = slab.at[0:32, 0:32].set(w1t)
    slab = slab.at[32, 0:32].set(b1.reshape(32))
    slab = slab.at[40:72, 0:16].set(w2t)
    slab = slab.at[168, 0:16].set(b2.reshape(16))
    slab = slab.at[176:192, 0:3].set(w3t)
    slab = slab.at[304, 0:3].set(b3.reshape(3))
    return slab


@jax.jit
def actor_forward(state, packed_params):
    B = state.shape[0]
    out = pl.pallas_call(
        actor_kernel,
        out_shape=jax.ShapeDtypeStruct((B, LANES), jnp.float32),   # lane-dense output slab
        in_specs=[
            pl.BlockSpec(memory_space=pltpu.MemorySpace.VMEM),     # state         (B, 32)
            pl.BlockSpec(memory_space=pltpu.MemorySpace.VMEM),     # packed params (312, 128)
        ],
        out_specs=pl.BlockSpec(memory_space=pltpu.MemorySpace.VMEM),
    )(state, packed_params)
    return out[:, :OUT_DIM]


def init_params(key):
    """Deterministic init mimicking torch.nn.Linear default (U[-1/sqrt(fan_in), 1/sqrt(fan_in)])."""
    def linear(key, fan_in, fan_out):
        kw, kb = jax.random.split(key)
        bound = 1.0 / jnp.sqrt(fan_in)
        # stored pre-transposed: (in, out)  (PyTorch Linear: y = x @ W.T + b)
        w_t = jax.random.uniform(kw, (fan_in, fan_out), jnp.float32, -bound, bound)
        b = jax.random.uniform(kb, (1, fan_out), jnp.float32, -bound, bound)
        return w_t, b

    k1, k2, k3 = jax.random.split(key, 3)
    w1t, b1 = linear(k1, IN_DIM, 32)
    w2t, b2 = linear(k2, 32, 16)
    w3t, b3 = linear(k3, 16, OUT_DIM)
    return (w1t, b1, w2t, b2, w3t, b3)


def actor_ref(state, params):
    """Pure-JAX reference for correctness check."""
    w1t, b1, w2t, b2, w3t, b3 = params
    h1 = jnp.maximum(state @ w1t + b1, 0.0)
    h2 = jnp.maximum(h1 @ w2t + b2, 0.0)
    logits = h2 @ w3t + b3
    return jax.nn.softmax(logits, axis=0)


if __name__ == "__main__":
    key = jax.random.PRNGKey(0)
    kp, kx = jax.random.split(key)
    params = init_params(kp)
    packed = pack_params(params)                              # built once; one DMA per call
    state = jax.random.normal(kx, (8, IN_DIM), jnp.float32)   # batch=8, feature=32

    out = actor_forward(state, packed)
    jax.block_until_ready(out)

    ref = actor_ref(state, params)
    assert out.shape == (8, OUT_DIM)
    assert jnp.allclose(out, ref, atol=1e-5, rtol=1e-5), "mismatch vs reference"
    # softmax over dim=0 -> each column sums to 1
    assert jnp.allclose(jnp.sum(out, axis=0), jnp.ones(OUT_DIM), atol=1e-5)

    print("KERNEL_OK")
</pallas_src>

<mosaic_0001>
module attributes {stable_mosaic.version = 11 : i64} {
  func.func @actor_kernel(%arg0: memref<8x32xf32, #tpu.memory_space<vmem>>, %arg1: memref<312x128xf32, #tpu.memory_space<vmem>>, %arg2: memref<8x128xf32, #tpu.memory_space<vmem>>) attributes {dimension_semantics = [], scalar_prefetch = 0 : i64, scratch_operands = 0 : i64, tpu.core_type = #tpu.core_type<tc>} {
    %c0 = arith.constant 0 : index
    %c0_0 = arith.constant 0 : index
    %0 = vector.load %arg0[%c0, %c0_0] : memref<8x32xf32, #tpu.memory_space<vmem>>, vector<8x32xf32>
    %c0_1 = arith.constant 0 : index
    %c0_2 = arith.constant 0 : index
    %1 = vector.load %arg1[%c0_1, %c0_2] : memref<312x128xf32, #tpu.memory_space<vmem>>, vector<32x128xf32>
    %c32 = arith.constant 32 : index
    %c0_3 = arith.constant 0 : index
    %2 = vector.load %arg1[%c32, %c0_3] : memref<312x128xf32, #tpu.memory_space<vmem>>, vector<1x128xf32>
    %c40 = arith.constant 40 : index
    %c0_4 = arith.constant 0 : index
    %3 = vector.load %arg1[%c40, %c0_4] : memref<312x128xf32, #tpu.memory_space<vmem>>, vector<128x128xf32>
    %c168 = arith.constant 168 : index
    %c0_5 = arith.constant 0 : index
    %4 = vector.load %arg1[%c168, %c0_5] : memref<312x128xf32, #tpu.memory_space<vmem>>, vector<1x128xf32>
    %c176 = arith.constant 176 : index
    %c0_6 = arith.constant 0 : index
    %5 = vector.load %arg1[%c176, %c0_6] : memref<312x128xf32, #tpu.memory_space<vmem>>, vector<128x128xf32>
    %c304 = arith.constant 304 : index
    %c0_7 = arith.constant 0 : index
    %6 = vector.load %arg1[%c304, %c0_7] : memref<312x128xf32, #tpu.memory_space<vmem>>, vector<1x128xf32>
    %cst = arith.constant dense<0.000000e+00> : vector<8x128xf32>
    %7 = tpu.matmul %0, %1, %cst {dimension_numbers = #tpu.dot_dimension_numbers<[1], [0], [0], [1], [0, 0, 1, 1], [], []>} : vector<8x32xf32>, vector<32x128xf32>, vector<8x128xf32> -> vector<8x128xf32>
    %8 = vector.broadcast %2 : vector<1x128xf32> to vector<8x128xf32>
    %9 = arith.addf %7, %8 : vector<8x128xf32>
    %cst_8 = arith.constant 0.000000e+00 : f32
    %10 = vector.broadcast %cst_8 : f32 to vector<8x128xf32>
    %11 = arith.maximumf %9, %10 : vector<8x128xf32>
    %cst_9 = arith.constant dense<0.000000e+00> : vector<8x128xf32>
    %12 = tpu.matmul %11, %3, %cst_9 {dimension_numbers = #tpu.dot_dimension_numbers<[1], [0], [0], [1], [0, 0, 1, 1], [], []>} : vector<8x128xf32>, vector<128x128xf32>, vector<8x128xf32> -> vector<8x128xf32>
    %13 = vector.broadcast %4 : vector<1x128xf32> to vector<8x128xf32>
    %14 = arith.addf %12, %13 : vector<8x128xf32>
    %cst_10 = arith.constant 0.000000e+00 : f32
    %15 = vector.broadcast %cst_10 : f32 to vector<8x128xf32>
    %16 = arith.maximumf %14, %15 : vector<8x128xf32>
    %cst_11 = arith.constant dense<0.000000e+00> : vector<8x128xf32>
    %17 = tpu.matmul %16, %5, %cst_11 {dimension_numbers = #tpu.dot_dimension_numbers<[1], [0], [0], [1], [0, 0, 1, 1], [], []>} : vector<8x128xf32>, vector<128x128xf32>, vector<8x128xf32> -> vector<8x128xf32>
    %18 = vector.broadcast %6 : vector<1x128xf32> to vector<8x128xf32>
    %19 = arith.addf %17, %18 : vector<8x128xf32>
    %cst_12 = arith.constant dense<0xFF800000> : vector<128xf32>
    %20 = vector.multi_reduction <maximumf>, %19, %cst_12 [0] : vector<8x128xf32> to vector<128xf32>
    %21 = vector.shape_cast %20 : vector<128xf32> to vector<1x128xf32>
    %22 = vector.broadcast %21 : vector<1x128xf32> to vector<8x128xf32>
    %23 = arith.subf %19, %22 : vector<8x128xf32>
    %24 = math.exp %23 : vector<8x128xf32>
    %cst_13 = arith.constant dense<0.000000e+00> : vector<128xf32>
    %25 = vector.multi_reduction <add>, %24, %cst_13 [0] : vector<8x128xf32> to vector<128xf32>
    %26 = vector.shape_cast %25 : vector<128xf32> to vector<1x128xf32>
    %27 = vector.broadcast %26 : vector<1x128xf32> to vector<8x128xf32>
    %28 = arith.divf %24, %27 : vector<8x128xf32>
    %c0_14 = arith.constant 0 : index
    %c0_15 = arith.constant 0 : index
    %29 = vector.load %arg2[%c0_14, %c0_15] : memref<8x128xf32, #tpu.memory_space<vmem>>, vector<8x128xf32>
    tpu.vector_store %arg2[%c0_14, %c0_15], %28 {strides = array<i32>} : memref<8x128xf32, #tpu.memory_space<vmem>>, vector<8x128xf32>,
    return
  }
}

</mosaic_0001>

<llo_original>
// kernel: actor_forward.1
$region0: #{actor_forward.1}
  #allocation0 [shape = 'u32[]', space=smem, size = 0x4, offset = 0x4, fixed_abs, tag = 'smem constant byte address 0x4 - core index']
  #allocation1 [shape = 'u32[144,128]{1,0:T(1,128)}', space=vmem, size = 0x12000, scoped, tag = 'internal scratch']
  %s0 = inlined_call_operand.hbm [shape: f32[8,32], index: 0, kind: input, shape index: {}]
  %s1 = inlined_call_operand.hbm [shape: f32[312,128], index: 1, kind: input, shape index: {}]
  %s2 = inlined_call_operand.vmem [shape: f32[8,128], index: 2, kind: output, shape index: {}]
  %s3 = sld [smem:[#allocation0]]
  $region26: #{actor_forward.1} parent=0
    _
  %s5 = ssub.s32 1, %s3
  %s6 = scalar_select 0, %s5, %s3
  $region1: #{actor_forward.1} parent=0
    #allocation2 [shape = 'u8[4096]{0}', space=vmem, size = 0x1000, scoped, tag = 'input window, operand 0, single buffered']
    #allocation3 [shape = 's32[1]{0}', space=sflag, size = 0x4, scoped, tag = 'scoped memory for actor_forward.1']
    #allocation4 [shape = 'u8[159744]{0}', space=vmem, size = 0x27000, scoped, tag = 'input window, operand 1, single buffered']
    #allocation5 [shape = 's32[1]{0}', space=sflag, size = 0x4, scoped, tag = 'scoped memory for actor_forward.1']
    %7 = vsyncpa [#allocation3], 0
    %8 = vsyncpa [#allocation5], 0
    // Predicated region
    $region2: #{actor_forward.1} parent=1 // pred_check
      _
    $region3: #{actor_forward.1} parent=1 // pred_check_branch
      %10 = sbr.rel (0) target = $region5
    $region4: #{actor_forward.1} parent=1 // pred_region
      %s12 = ssub.s32 128, 128
      %13 = vsyncadd [#allocation3], %s12
      %s15 = sshll.u32 [#allocation2], 4
      %s16 = int_to_ptr.vmem [resolvable:$true] %s15
      %18 = dma.hbm_to_vmem [thread:$0]  %s0, 128, %s16, [#allocation3]
    $region5: #{actor_forward.1} parent=1 // pred_fallthru
      _
    // Predicated region
    $region6: #{actor_forward.1} parent=1 // pred_check
      _
    $region7: #{actor_forward.1} parent=1 // pred_check_branch
      %20 = sbr.rel (0) target = $region9
    $region8: #{actor_forward.1} parent=1 // pred_region
      %s22 = ssub.s32 4992, 4992
      %23 = vsyncadd [#allocation5], %s22
      %s24 = sshll.u32 [#allocation4], 4
      %s25 = int_to_ptr.vmem [resolvable:$true] %s24
      %30 = dma.hbm_to_vmem [thread:$0]  %s1, 4992, %s25, [#allocation5], 128, 128, 8
    $region9: #{actor_forward.1} parent=1 // pred_fallthru
      _
    // Predicated region
    $region10: #{actor_forward.1} parent=1 // pred_check
      _
    $region11: #{actor_forward.1} parent=1 // pred_check_branch
      %32 = sbr.rel (0) target = $region13
    $region12: #{actor_forward.1} parent=1 // pred_region
      %33 = dma.done [#allocation3], 128
    $region13: #{actor_forward.1} parent=1 // pred_fallthru
      _
    // Predicated region
    $region14: #{actor_forward.1} parent=1 // pred_check
      _
    $region15: #{actor_forward.1} parent=1 // pred_check_branch
      %35 = sbr.rel (0) target = $region17
    $region16: #{actor_forward.1} parent=1 // pred_region
      %36 = dma.done [#allocation5], 4992
    $region17: #{actor_forward.1} parent=1 // pred_fallthru
      _
    %v37 = vld [vmem:[#allocation2] sm:$0xff]
    %v38 = vld [vmem:[#allocation4] sm:$0xff]
    %v39 = vld [vmem:[#allocation4 + $0x8] sm:$0xff]
    %v40 = vld [vmem:[#allocation4 + $0x10] sm:$0xff]
    %v41 = vld [vmem:[#allocation4 + $0x18] sm:$0xff]
    %v42 = vld [vmem:[#allocation4 + $0x20] sm:$0x1]
    %v43 = vld [vmem:[#allocation4 + $0x28] sm:$0xff]
    %v44 = vld [vmem:[#allocation4 + $0x30] sm:$0xff]
    %v45 = vld [vmem:[#allocation4 + $0x38] sm:$0xff]
    %v46 = vld [vmem:[#allocation4 + $0x40] sm:$0xff]
    %v47 = vld [vmem:[#allocation4 + $0x48] sm:$0xff]
    %v48 = vld [vmem:[#allocation4 + $0x50] sm:$0xff]
    %v49 = vld [vmem:[#allocation4 + $0x58] sm:$0xff]
    %v50 = vld [vmem:[#allocation4 + $0x60] sm:$0xff]
    %v51 = vld [vmem:[#allocation4 + $0x68] sm:$0xff]
    %v52 = vld [vmem:[#allocation4 + $0x70] sm:$0xff]
    %v53 = vld [vmem:[#allocation4 + $0x78] sm:$0xff]
    %v54 = vld [vmem:[#allocation4 + $0x80] sm:$0xff]
    %v55 = vld [vmem:[#allocation4 + $0x88] sm:$0xff]
    %v56 = vld [vmem:[#allocation4 + $0x90] sm:$0xff]
    %v57 = vld [vmem:[#allocation4 + $0x98] sm:$0xff]
    %v58 = vld [vmem:[#allocation4 + $0xa0] sm:$0xff]
    %v59 = vld [vmem:[#allocation4 + $0xa8] sm:$0x1]
    %v60 = vld [vmem:[#allocation4 + $0xb0] sm:$0xff]
    %v61 = vld [vmem:[#allocation4 + $0xb8] sm:$0xff]
    %v62 = vld [vmem:[#allocation4 + $0xc0] sm:$0xff]
    %v63 = vld [vmem:[#allocation4 + $0xc8] sm:$0xff]
    %v64 = vld [vmem:[#allocation4 + $0xd0] sm:$0xff]
    %v65 = vld [vmem:[#allocation4 + $0xd8] sm:$0xff]
    %v66 = vld [vmem:[#allocation4 + $0xe0] sm:$0xff]
    %v67 = vld [vmem:[#allocation4 + $0xe8] sm:$0xff]
    %v68 = vld [vmem:[#allocation4 + $0xf0] sm:$0xff]
    %v69 = vld [vmem:[#allocation4 + $0xf8] sm:$0xff]
    %v70 = vld [vmem:[#allocation4 + $0x100] sm:$0xff]
    %v71 = vld [vmem:[#allocation4 + $0x108] sm:$0xff]
    %v72 = vld [vmem:[#allocation4 + $0x110] sm:$0xff]
    %v73 = vld [vmem:[#allocation4 + $0x118] sm:$0xff]
    %v74 = vld [vmem:[#allocation4 + $0x120] sm:$0xff]
    %v75 = vld [vmem:[#allocation4 + $0x128] sm:$0xff]
    %v76 = vld [vmem:[#allocation4 + $0x130] sm:$0x1]
    %v77 = vlaneseq
    %v78 = vshrl.u32 %v77, 7
    %v79 = vsub.s32 0, %v78
    %v80 = vrot.slane %v42, %v79
    %vm81 = vcmask 261120
    %v83 = vsel %vm81, %v37, 0
    %85 = vmatprep.subr.mxu0 0.0
    %86 = vmatpush1.msra.mxu0 %v38
    %87 = vmatprep.subr.mxu0 0.0
    %88 = vmatpush1.msra.mxu0 %v39
    %89 = vmatprep.subr.mxu0 0.0
    %90 = vmatpush1.msra.mxu0 %v40
    %91 = vmatprep.subr.mxu0 0.0
    %92 = vmatpush1.msra.mxu0 %v41
    %93 = vmatprep.subr.mxu0 0.0
    %94 = vmatpush1.msra.mxu0 0.0
    %95 = vmatprep.subr.mxu0 0.0
    %96 = vmatpush1.msra.mxu0 0.0
    %97 = vmatprep.subr.mxu0 0.0
    %98 = vmatpush1.msra.mxu0 0.0
    %99 = vmatprep.subr.mxu0 0.0
    %100 = vmatpush1.msra.mxu0 0.0
    %101 = vmatprep.subr.mxu0 0.0
    %102 = vmatpush1.msra.mxu0 0.0
    %103 = vmatprep.subr.mxu0 0.0
    %104 = vmatpush1.msra.mxu0 0.0
    %105 = vmatprep.subr.mxu0 0.0
    %106 = vmatpush1.msra.mxu0 0.0
    %107 = vmatprep.subr.mxu0 0.0
    %108 = vmatpush1.msra.mxu0 0.0
    %109 = vmatprep.subr.mxu0 0.0
    %110 = vmatpush1.msra.mxu0 0.0
    %111 = vmatprep.subr.mxu0 0.0
    %112 = vmatpush1.msra.mxu0 0.0
    %113 = vmatprep.subr.mxu0 0.0
    %114 = vmatpush1.msra.mxu0 0.0
    %115 = vmatprep.subr.mxu0 0.0
    %116 = vmatpush1.msra.mxu0 0.0
    %117 = vmatprep.subr.mxu0 0.0
    %118 = vmatpush1.msra.mxu0 0.0
    %119 = vmatprep.subr.mxu0 0.0
    %120 = vmatpush1.msra.mxu0 0.0
    %121 = vmatprep.subr.mxu0 0.0
    %122 = vmatpush1.msra.mxu0 0.0
    %123 = vmatprep.subr.mxu0 0.0
    %124 = vmatpush1.msra.mxu0 0.0
    %125 = vmatprep.subr.mxu0 0.0
    %126 = vmatpush1.msra.mxu0 0.0
    %127 = vmatprep.subr.mxu0 0.0
    %128 = vmatpush1.msra.mxu0 0.0
    %129 = vmatprep.subr.mxu0 0.0
    %130 = vmatpush1.msra.mxu0 0.0
    %131 = vmatprep.subr.mxu0 0.0
    %132 = vmatpush1.msra.mxu0 0.0
    %133 = vmatprep.subr.mxu0 0.0
    %134 = vmatpush1.msra.mxu0 0.0
    %135 = vmatprep.subr.mxu0 0.0
    %136 = vmatpush1.msra.mxu0 0.0
    %137 = vmatprep.subr.mxu0 0.0
    %138 = vmatpush1.msra.mxu0 0.0
    %139 = vmatprep.subr.mxu0 0.0
    %140 = vmatpush1.msra.mxu0 0.0
    %141 = vmatprep.subr.mxu0 0.0
    %142 = vmatpush1.msra.mxu0 0.0
    %143 = vmatprep.subr.mxu0 0.0
    %144 = vmatpush1.msra.mxu0 0.0
    %145 = vmatprep.subr.mxu0 0.0
    %146 = vmatpush1.msra.mxu0 0.0
    %147 = vmatprep.subr.mxu0 0.0
    %148 = vmatpush1.msra.mxu0 0.0
    %149 = vmatprep.mubr.f32.mxu0 0.0
    %150 = vmatmul.mubr.f32.gmra.mrb[0].mxu0 %v83
    %v151 = vpop.f32.mrb[0].mxu0
    %v152 = vadd.f32 %v80, %v151
    %v153 = vpop.f32.mrb[0].mxu0
    %154 = vdwg.mxu0
    %v155 = vmax.f32 %v152, 0.0
    %v156 = vlaneseq
    %v157 = vshrl.u32 %v156, 7
    %v158 = vsub.s32 0, %v157
    %v159 = vrot.slane %v59, %v158
    %160 = vmatprep.subr.mxu0 0.0
    %161 = vmatpush1.msra.mxu0 %v43
    %162 = vmatprep.subr.mxu0 0.0
    %163 = vmatpush1.msra.mxu0 %v44
    %164 = vmatprep.subr.mxu0 0.0
    %165 = vmatpush1.msra.mxu0 %v45
    %166 = vmatprep.subr.mxu0 0.0
    %167 = vmatpush1.msra.mxu0 %v46
    %168 = vmatprep.subr.mxu0 0.0
    %169 = vmatpush1.msra.mxu0 %v47
    %170 = vmatprep.subr.mxu0 0.0
    %171 = vmatpush1.msra.mxu0 %v48
    %172 = vmatprep.subr.mxu0 0.0
    %173 = vmatpush1.msra.mxu0 %v49
    %174 = vmatprep.subr.mxu0 0.0
    %175 = vmatpush1.msra.mxu0 %v50
    %176 = vmatprep.subr.mxu0 0.0
    %177 = vmatpush1.msra.mxu0 %v51
    %178 = vmatprep.subr.mxu0 0.0
    %179 = vmatpush1.msra.mxu0 %v52
    %180 = vmatprep.subr.mxu0 0.0
    %181 = vmatpush1.msra.mxu0 %v53
    %182 = vmatprep.subr.mxu0 0.0
    %183 = vmatpush1.msra.mxu0 %v54
    %184 = vmatprep.subr.mxu0 0.0
    %185 = vmatpush1.msra.mxu0 %v55
    %186 = vmatprep.subr.mxu0 0.0
    %187 = vmatpush1.msra.mxu0 %v56
    %188 = vmatprep.subr.mxu0 0.0
    %189 = vmatpush1.msra.mxu0 %v57
    %190 = vmatprep.subr.mxu0 0.0
    %191 = vmatpush1.msra.mxu0 %v58
    %192 = vmatprep.subr.mxu0 0.0
    %193 = vmatpush1.msra.mxu0 0.0
    %194 = vmatprep.subr.mxu0 0.0
    %195 = vmatpush1.msra.mxu0 0.0
    %196 = vmatprep.subr.mxu0 0.0
    %197 = vmatpush1.msra.mxu0 0.0
    %198 = vmatprep.subr.mxu0 0.0
    %199 = vmatpush1.msra.mxu0 0.0
    %200 = vmatprep.subr.mxu0 0.0
    %201 = vmatpush1.msra.mxu0 0.0
    %202 = vmatprep.subr.mxu0 0.0
    %203 = vmatpush1.msra.mxu0 0.0
    %204 = vmatprep.subr.mxu0 0.0
    %205 = vmatpush1.msra.mxu0 0.0
    %206 = vmatprep.subr.mxu0 0.0
    %207 = vmatpush1.msra.mxu0 0.0
    %208 = vmatprep.subr.mxu0 0.0
    %209 = vmatpush1.msra.mxu0 0.0
    %210 = vmatprep.subr.mxu0 0.0
    %211 = vmatpush1.msra.mxu0 0.0
    %212 = vmatprep.subr.mxu0 0.0
    %213 = vmatpush1.msra.mxu0 0.0
    %214 = vmatprep.subr.mxu0 0.0
    %215 = vmatpush1.msra.mxu0 0.0
    %216 = vmatprep.subr.mxu0 0.0
    %217 = vmatpush1.msra.mxu0 0.0
    %218 = vmatprep.subr.mxu0 0.0
    %219 = vmatpush1.msra.mxu0 0.0
    %220 = vmatprep.subr.mxu0 0.0
    %221 = vmatpush1.msra.mxu0 0.0
    %222 = vmatprep.subr.mxu0 0.0
    %223 = vmatpush1.msra.mxu0 0.0
    %224 = vmatprep.mubr.f32.mxu0 0.0
    %225 = vmatmul.mubr.f32.gmra.mrb[0].mxu0 %v155
    %v226 = vpop.f32.mrb[0].mxu0
    %v227 = vadd.f32 %v159, %v226
    %v228 = vpop.f32.mrb[0].mxu0
    %229 = vdwg.mxu0
    %v230 = vmax.f32 %v227, 0.0
    %v231 = vlaneseq
    %v232 = vshrl.u32 %v231, 7
    %v233 = vsub.s32 0, %v232
    %v234 = vrot.slane %v76, %v233
    %235 = vmatprep.subr.mxu0 0.0
    %236 = vmatpush1.msra.mxu0 %v60
    %237 = vmatprep.subr.mxu0 0.0
    %238 = vmatpush1.msra.mxu0 %v61
    %239 = vmatprep.subr.mxu0 0.0
    %240 = vmatpush1.msra.mxu0 %v62
    %241 = vmatprep.subr.mxu0 0.0
    %242 = vmatpush1.msra.mxu0 %v63
    %243 = vmatprep.subr.mxu0 0.0
    %244 = vmatpush1.msra.mxu0 %v64
    %245 = vmatprep.subr.mxu0 0.0
    %246 = vmatpush1.msra.mxu0 %v65
    %247 = vmatprep.subr.mxu0 0.0
    %248 = vmatpush1.msra.mxu0 %v66
    %249 = vmatprep.subr.mxu0 0.0
    %250 = vmatpush1.msra.mxu0 %v67
    %251 = vmatprep.subr.mxu0 0.0
    %252 = vmatpush1.msra.mxu0 %v68
    %253 = vmatprep.subr.mxu0 0.0
    %254 = vmatpush1.msra.mxu0 %v69
    %255 = vmatprep.subr.mxu0 0.0
    %256 = vmatpush1.msra.mxu0 %v70
    %257 = vmatprep.subr.mxu0 0.0
    %258 = vmatpush1.msra.mxu0 %v71
    %259 = vmatprep.subr.mxu0 0.0
    %260 = vmatpush1.msra.mxu0 %v72
    %261 = vmatprep.subr.mxu0 0.0
    %262 = vmatpush1.msra.mxu0 %v73
    %263 = vmatprep.subr.mxu0 0.0
    %264 = vmatpush1.msra.mxu0 %v74
    %265 = vmatprep.subr.mxu0 0.0
    %266 = vmatpush1.msra.mxu0 %v75
    %267 = vmatprep.subr.mxu0 0.0
    %268 = vmatpush1.msra.mxu0 0.0
    %269 = vmatprep.subr.mxu0 0.0
    %270 = vmatpush1.msra.mxu0 0.0
    %271 = vmatprep.subr.mxu0 0.0
    %272 = vmatpush1.msra.mxu0 0.0
    %273 = vmatprep.subr.mxu0 0.0
    %274 = vmatpush1.msra.mxu0 0.0
    %275 = vmatprep.subr.mxu0 0.0
    %276 = vmatpush1.msra.mxu0 0.0
    %277 = vmatprep.subr.mxu0 0.0
    %278 = vmatpush1.msra.mxu0 0.0
    %279 = vmatprep.subr.mxu0 0.0
    %280 = vmatpush1.msra.mxu0 0.0
    %281 = vmatprep.subr.mxu0 0.0
    %282 = vmatpush1.msra.mxu0 0.0
    %283 = vmatprep.subr.mxu0 0.0
    %284 = vmatpush1.msra.mxu0 0.0
    %285 = vmatprep.subr.mxu0 0.0
    %286 = vmatpush1.msra.mxu0 0.0
    %287 = vmatprep.subr.mxu0 0.0
    %288 = vmatpush1.msra.mxu0 0.0
    %289 = vmatprep.subr.mxu0 0.0
    %290 = vmatpush1.msra.mxu0 0.0
    %291 = vmatprep.subr.mxu0 0.0
    %292 = vmatpush1.msra.mxu0 0.0
    %293 = vmatprep.subr.mxu0 0.0
    %294 = vmatpush1.msra.mxu0 0.0
    %295 = vmatprep.subr.mxu0 0.0
    %296 = vmatpush1.msra.mxu0 0.0
    %297 = vmatprep.subr.mxu0 0.0
    %298 = vmatpush1.msra.mxu0 0.0
    %299 = vmatprep.mubr.f32.mxu0 0.0
    %300 = vmatmul.mubr.f32.gmra.mrb[0].mxu0 %v230
    %v301 = vpop.f32.mrb[0].mxu0
    %v302 = vadd.f32 %v234, %v301
    %v303 = vpop.f32.mrb[0].mxu0
    %304 = vdwg.mxu0
    %v305 = vrot.slane %v302, 4
    %v306 = vmax.f32 %v302, %v305
    %v307 = vrot.slane %v306, 2
    %v308 = vmax.f32 %v306, %v307
    %v309 = vrot.slane %v308, 1
    %v310 = vmax.f32 %v308, %v309
    %v311 = vsub.f32 %v302, %v310
    %v312 = vmul.f32 %v311, 1.442695
    %v313 = vpow.pop %v312
    %v314 = vrot.slane %v313, 4
    %v315 = vadd.f32 %v313, %v314
    %v316 = vrot.slane %v315, 2
    %v317 = vadd.f32 %v315, %v316
    %v318 = vrot.slane %v317, 1
    %v319 = vadd.f32 %v317, %v318
    %v320 = vrcp.pop %v319
    %v321 = vmul.f32 %v313, %v320
    %322 = vst [vmem:[%s2] sm:$0xff] %v321
    // Predicated region
    $region18: #{actor_forward.1} parent=1 // pred_check
      _
    $region19: #{actor_forward.1} parent=1 // pred_check_branch
      %324 = sbr.rel (0) target = $region21
    $region20: #{actor_forward.1} parent=1 // pred_region
      _
    $region21: #{actor_forward.1} parent=1 // pred_fallthru
      _
    // Predicated region
    $region22: #{actor_forward.1} parent=1 // pred_check
      _
    $region23: #{actor_forward.1} parent=1 // pred_check_branch
      %326 = sbr.rel (0) target = $region25
    $region24: #{actor_forward.1} parent=1 // pred_region
      _
    $region25: #{actor_forward.1} parent=1 // pred_fallthru
      _
    %327 = vsyncpa [#allocation3], 1
    %328 = vsyncpa [#allocation5], 1

</llo_original>
